<compile_context>
chip_gen: v7x
topology: tpu7x:2x2x1
jax: 0.10.0
libtpu: 0.0.40
codegen_flags: <defaults>
</compile_context>

<pallas_src>
import jax
import jax.numpy as jnp
import numpy as np
from jax.experimental import pallas as pl
from jax.experimental.pallas import tpu as pltpu


def _round_up(x, m):
    return (x + m - 1) // m * m


# ---------------------------------------------------------------------------
# Phase 1: hoisted input projection  X2H = x @ Wx^T + (bx + bh_reset/update)
# ---------------------------------------------------------------------------
def _x2h_kernel(x_ref, wx_ref, b_ref, o_ref):
    o_ref[...] = (
        jnp.dot(x_ref[...], wx_ref[...], preferred_element_type=jnp.float32)
        + b_ref[...]
    )


# ---------------------------------------------------------------------------
# Phase 2: sequential GRU recurrence (single invocation, in-kernel time loop)
# ---------------------------------------------------------------------------
def _make_recurrence_kernel(T, Bp, Hp, matmul_dtype, unroll):
    def kernel(x2h_ref, wh_ref, bhn_ref, out_ref):
        def step(t, h):
            # Pre-projected input for step t (input bias + bh_r/bh_u already
            # folded in).  Lane-dense (Bp, 3*Hp) slab, 8-aligned row start.
            xt = x2h_ref[pl.ds(t * Bp, Bp), :]
            # Recurrent projection on the MXU, f32 accumulation.
            h_t = jnp.dot(h.astype(matmul_dtype), wh_ref[...],
                          preferred_element_type=jnp.float32)
            # Gate slices fall on 128-lane tile boundaries (Hp % 128 == 0).
            x_r, x_u, x_n = xt[:, :Hp], xt[:, Hp:2 * Hp], xt[:, 2 * Hp:]
            h_r, h_u, h_n = h_t[:, :Hp], h_t[:, Hp:2 * Hp], h_t[:, 2 * Hp:]
            r = jax.nn.sigmoid(x_r + h_r)
            u = jax.nn.sigmoid(x_u + h_u)
            n = jnp.tanh(x_n + r * (h_n + bhn_ref[...]))   # bh_new stays here
            hy = u * h + (1.0 - u) * n                     # f32 gate math
            out_ref[t] = hy
            return hy

        h0 = jnp.zeros((Bp, Hp), jnp.float32)
        jax.lax.fori_loop(0, T, step, h0, unroll=unroll)

    return kernel


def gru_forward(x, wx_t, wh_t, bx, bh, *, matmul_dtype=jnp.bfloat16):
    """GRUCell.forward with hidden=None.

    x:    (T, B, I)  float32  (seq_len, batch, input_size)
    wx_t: (I, 3H)    x2h weight, pre-transposed (PyTorch Linear is (3H, I))
    wh_t: (H, 3H)    h2h weight, pre-transposed
    bx, bh: (1, 3H)
    Returns (stacked hidden states (T, B, H), final hidden (B, H)).
    """
    T, B, I = x.shape
    H = wh_t.shape[0]
    assert wx_t.shape == (I, 3 * H) and wh_t.shape == (H, 3 * H)
    assert bx.shape == (1, 3 * H) and bh.shape == (1, 3 * H)

    Hp = _round_up(H, 128)   # lane-dense gate blocks + lane-dense output store
    Bp = _round_up(B, 8)     # f32 sublane

    # --- pad parameters: each gate gets its own 128-aligned column block ----
    def pad_gates(w):
        r, u, n = jnp.split(w, 3, axis=1)
        z = jnp.zeros((w.shape[0], Hp - H), w.dtype)
        return jnp.concatenate([r, z, u, z, n, z], axis=1)

    wx_p = pad_gates(wx_t)                                   # (I, 3Hp)
    wh_p = jnp.pad(pad_gates(wh_t), ((0, Hp - H), (0, 0)))   # (Hp, 3Hp)
    bx_p = pad_gates(bx)                                     # (1, 3Hp)
    bh_p = pad_gates(bh)                                     # (1, 3Hp)
    # Fold bh_reset / bh_update into the hoisted projection bias; bh_new must
    # stay inside the reset-gate multiply so it is passed separately.
    b_fold = bx_p + bh_p.at[:, 2 * Hp:].set(0.0)             # (1, 3Hp)
    bh_new = bh_p[:, 2 * Hp:]                                # (1, Hp)

    # --- phase 1: one big (T*Bp, I) @ (I, 3Hp) matmul, parallel grid --------
    x_p = jnp.pad(x, ((0, 0), (0, Bp - B), (0, 0)))          # (T, Bp, I)
    x2d = x_p.reshape(T * Bp, I)
    R = T * Bp
    TM = R if R <= 512 else 512
    Rg = _round_up(R, TM)
    if Rg != R:
        x2d = jnp.pad(x2d, ((0, Rg - R), (0, 0)))

    x2h = pl.pallas_call(
        _x2h_kernel,
        out_shape=jax.ShapeDtypeStruct((Rg, 3 * Hp), jnp.float32),
        grid_spec=pltpu.PrefetchScalarGridSpec(
            num_scalar_prefetch=0,
            grid=(Rg // TM,),
            in_specs=[
                pl.BlockSpec((TM, I), lambda i: (i, 0)),       # x row tile
                pl.BlockSpec((I, 3 * Hp), lambda i: (0, 0)),   # Wx^T resident
                pl.BlockSpec((1, 3 * Hp), lambda i: (0, 0)),   # folded bias
            ],
            out_specs=pl.BlockSpec((TM, 3 * Hp), lambda i: (i, 0)),
        ),
        compiler_params=pltpu.CompilerParams(
            dimension_semantics=("parallel",)),
    )(x2d.astype(matmul_dtype), wx_p.astype(matmul_dtype), b_fold)

    # --- phase 2: sequential recurrence, everything resident in VMEM --------
    # No grid => no per-step grid/DMA overhead and single-buffered (not
    # double-buffered) resident operands, which keeps the VMEM budget small.
    # TODO(synk): for long sequences / large models, stream x2h and tile Wh
    # with pltpu.emit_pipeline instead of keeping them fully resident, and
    # split a (padded) batch axis across TensorCores.
    kernel = _make_recurrence_kernel(T, Bp, Hp, matmul_dtype,
                                     unroll=(T <= 32))
    out_full = pl.pallas_call(
        kernel,
        out_shape=jax.ShapeDtypeStruct((T, Bp, Hp), jnp.float32),
        in_specs=[
            pl.BlockSpec(memory_space=pltpu.MemorySpace.VMEM),  # x2h
            pl.BlockSpec(memory_space=pltpu.MemorySpace.VMEM),  # Wh^T
            pl.BlockSpec(memory_space=pltpu.MemorySpace.VMEM),  # bh_new
        ],
        out_specs=pl.BlockSpec(memory_space=pltpu.MemorySpace.VMEM),
    )(x2h, wh_p.astype(matmul_dtype), bh_new)

    out = out_full[:, :B, :H]
    return out, out[T - 1]


def gru_reference(x, wx_t, wh_t, bx, bh):
    """Plain-JAX f32 reference matching the PyTorch module exactly."""
    T, B, I = x.shape
    H = wh_t.shape[0]
    h = jnp.zeros((B, H), jnp.float32)
    outs = []
    for t in range(T):
        x_t = x[t] @ wx_t + bx
        h_t = h @ wh_t + bh
        x_r, x_u, x_n = x_t[:, :H], x_t[:, H:2 * H], x_t[:, 2 * H:]
        h_r, h_u, h_n = h_t[:, :H], h_t[:, H:2 * H], h_t[:, 2 * H:]
        r = jax.nn.sigmoid(x_r + h_r)
        u = jax.nn.sigmoid(x_u + h_u)
        n = jnp.tanh(x_n + r * h_n)
        h = u * h + (1.0 - u) * n
        outs.append(h)
    return jnp.stack(outs, axis=0), h


if __name__ == "__main__":
    T, B, I, H = 8, 2, 16, 32

    key = jax.random.PRNGKey(0)
    kx, kwx, kwh, kbx, kbh = jax.random.split(key, 5)

    # Deterministic parameter init mimicking reset_parameters: U(-std, std).
    std = 1.0 / np.sqrt(H)
    # PyTorch Linear weight is (3H, in); store transposed (in, 3H) here.
    wx_t = jax.random.uniform(kwx, (I, 3 * H), jnp.float32, -std, std)
    wh_t = jax.random.uniform(kwh, (H, 3 * H), jnp.float32, -std, std)
    bx = jax.random.uniform(kbx, (1, 3 * H), jnp.float32, -std, std)
    bh = jax.random.uniform(kbh, (1, 3 * H), jnp.float32, -std, std)

    x = jax.random.normal(kx, (T, B, I), jnp.float32)

    ref_out, ref_h = gru_reference(x, wx_t, wh_t, bx, bh)

    # Exact-precision path (f32 matmuls) -- strict check.
    out32, h32 = gru_forward(x, wx_t, wh_t, bx, bh, matmul_dtype=jnp.float32)
    out32 = jax.block_until_ready(out32)
    h32 = jax.block_until_ready(h32)
    np.testing.assert_allclose(np.asarray(out32), np.asarray(ref_out),
                               rtol=1e-5, atol=1e-5)
    np.testing.assert_allclose(np.asarray(h32), np.asarray(ref_h),
                               rtol=1e-5, atol=1e-5)

    # Fast path (bf16 operands on the MXU, f32 accumulation + gate math).
    out_bf, h_bf = gru_forward(x, wx_t, wh_t, bx, bh,
                               matmul_dtype=jnp.bfloat16)
    out_bf = jax.block_until_ready(out_bf)
    h_bf = jax.block_until_ready(h_bf)
    np.testing.assert_allclose(np.asarray(out_bf), np.asarray(ref_out),
                               rtol=3e-2, atol=3e-2)
    np.testing.assert_allclose(np.asarray(h_bf), np.asarray(ref_h),
                               rtol=3e-2, atol=3e-2)

    print("KERNEL_OK")
</pallas_src>

<mosaic_0001>
module attributes {stable_mosaic.version = 11 : i64} {
  func.func @_x2h_kernel(%arg0: i32, %arg1: memref<64x16xf32, #tpu.memory_space<vmem>>, %arg2: memref<16x384xf32, #tpu.memory_space<vmem>>, %arg3: memref<1x384xf32, #tpu.memory_space<vmem>>, %arg4: memref<64x384xf32, #tpu.memory_space<vmem>>) attributes {dimension_semantics = [#tpu.dimension_semantics<parallel>], iteration_bounds = array<i64: 1>, scalar_prefetch = 0 : i64, scratch_operands = 0 : i64, tpu.core_type = #tpu.core_type<tc>, window_params = [{transform_indices = @transform_0, window_bounds = array<i64: 64, 16>}, {pipeline_mode = #tpu.pipeline_mode<synchronous>, transform_indices = @transform_1, window_bounds = array<i64: 16, 384>}, {pipeline_mode = #tpu.pipeline_mode<synchronous>, transform_indices = @transform_2, window_bounds = array<i64: 1, 384>}, {transform_indices = @transform_3, window_bounds = array<i64: 64, 384>}]} {
    %c0 = arith.constant 0 : index
    %c0_0 = arith.constant 0 : index
    %0 = vector.load %arg1[%c0, %c0_0] : memref<64x16xf32, #tpu.memory_space<vmem>>, vector<64x16xf32>
    %c0_1 = arith.constant 0 : index
    %c0_2 = arith.constant 0 : index
    %1 = vector.load %arg2[%c0_1, %c0_2] : memref<16x384xf32, #tpu.memory_space<vmem>>, vector<16x384xf32>
    %cst = arith.constant dense<0.000000e+00> : vector<64x384xf32>
    %2 = tpu.matmul %0, %1, %cst {dimension_numbers = #tpu.dot_dimension_numbers<[1], [0], [0], [1], [0, 0, 1, 1], [], []>} : vector<64x16xf32>, vector<16x384xf32>, vector<64x384xf32> -> vector<64x384xf32>
    %c0_3 = arith.constant 0 : index
    %c0_4 = arith.constant 0 : index
    %3 = vector.load %arg3[%c0_3, %c0_4] : memref<1x384xf32, #tpu.memory_space<vmem>>, vector<1x384xf32>
    %4 = vector.broadcast %3 : vector<1x384xf32> to vector<64x384xf32>
    %5 = arith.addf %2, %4 : vector<64x384xf32>
    %c0_5 = arith.constant 0 : index
    %c0_6 = arith.constant 0 : index
    %6 = vector.load %arg4[%c0_5, %c0_6] : memref<64x384xf32, #tpu.memory_space<vmem>>, vector<64x384xf32>
    tpu.vector_store %arg4[%c0_5, %c0_6], %5 {strides = array<i32>} : memref<64x384xf32, #tpu.memory_space<vmem>>, vector<64x384xf32>,
    return
  }
  func.func @transform_0(%arg0: i32) -> (i32, i32) {
    %c0_i32 = arith.constant 0 : i32
    %c0_i32_0 = arith.constant 0 : i32
    return %arg0, %c0_i32 : i32, i32
  }
  func.func @transform_1(%arg0: i32) -> (i32, i32) {
    %c0_i32 = arith.constant 0 : i32
    %c0_i32_0 = arith.constant 0 : i32
    %c0_i32_1 = arith.constant 0 : i32
    return %c0_i32, %c0_i32_0 : i32, i32
  }
  func.func @transform_2(%arg0: i32) -> (i32, i32) {
    %c0_i32 = arith.constant 0 : i32
    %c0_i32_0 = arith.constant 0 : i32
    %c0_i32_1 = arith.constant 0 : i32
    return %c0_i32, %c0_i32_0 : i32, i32
  }
  func.func @transform_3(%arg0: i32) -> (i32, i32) {
    %c0_i32 = arith.constant 0 : i32
    %c0_i32_0 = arith.constant 0 : i32
    return %arg0, %c0_i32 : i32, i32
  }
}

</mosaic_0001>

<llo_original>
// kernel: tpu_custom_call.1
$region0: #{tpu_custom_call.1}
  #allocation0 [shape = 'u32[]', space=smem, size = 0x4, offset = 0x4, fixed_abs, tag = 'smem constant byte address 0x4 - core index']
  #allocation1 [shape = 'u32[144,128]{1,0:T(1,128)}', space=vmem, size = 0x12000, scoped, tag = 'internal scratch']
  %s0 = inlined_call_operand.vmem [shape: f32[64,16], index: 0, kind: input, shape index: {}]
  %s1 = inlined_call_operand.vmem [shape: f32[16,384], index: 1, kind: input, shape index: {}]
  %s2 = inlined_call_operand.vmem [shape: f32[1,384], index: 2, kind: input, shape index: {}]
  %s3 = inlined_call_operand.hbm [shape: f32[64,384], index: 3, kind: output, shape index: {}]
  %s4 = sld [smem:[#allocation0]]
  $region22: #{tpu_custom_call.1} parent=0
    _
  %s6 = ssub.s32 1, %s4
  %s7 = scalar_select 0, %s6, %s4
  $region1: #{tpu_custom_call.1} parent=0
    #allocation2 [shape = 'u8[98304]{0}', space=vmem, size = 0x18000, scoped, tag = 'output window, operand 0, single buffered']
    #allocation3 [shape = 's32[1]{0}', space=sflag, size = 0x4, scoped, tag = 'scoped memory for tpu_custom_call.1']
    %8 = vsyncpa [#allocation3], 0
    // Predicated region
    $region2: #{tpu_custom_call.1} parent=1 // pred_check
      _
    $region3: #{tpu_custom_call.1} parent=1 // pred_check_branch
      %10 = sbr.rel (0) target = $region5
    $region4: #{tpu_custom_call.1} parent=1 // pred_region
      _
    $region5: #{tpu_custom_call.1} parent=1 // pred_fallthru
      _
    // Predicated region
    $region6: #{tpu_custom_call.1} parent=1 // pred_check
      _
    $region7: #{tpu_custom_call.1} parent=1 // pred_check_branch
      %12 = sbr.rel (0) target = $region9
    $region8: #{tpu_custom_call.1} parent=1 // pred_region
      _
    $region9: #{tpu_custom_call.1} parent=1 // pred_fallthru
      _
    // Predicated region
    $region10: #{tpu_custom_call.1} parent=1 // pred_check
      _
    $region11: #{tpu_custom_call.1} parent=1 // pred_check_branch
      %14 = sbr.rel (0) target = $region13
    $region12: #{tpu_custom_call.1} parent=1 // pred_region
      _
    $region13: #{tpu_custom_call.1} parent=1 // pred_fallthru
      _
    %v15 = vld [vmem:[%s0] sm:$0xff]
    %v16 = vld [vmem:[%s0 + $0x8] sm:$0xff]
    %v17 = vld [vmem:[%s0 + $0x10] sm:$0xff]
    %v18 = vld [vmem:[%s0 + $0x18] sm:$0xff]
    %v19 = vld [vmem:[%s0 + $0x20] sm:$0xff]
    %v20 = vld [vmem:[%s0 + $0x28] sm:$0xff]
    %v21 = vld [vmem:[%s0 + $0x30] sm:$0xff]
    %v22 = vld [vmem:[%s0 + $0x38] sm:$0xff]
    %v23 = vld [vmem:[%s1] sm:$0xff]
    %v24 = vld [vmem:[%s1 + $0x8] sm:$0xff]
    %v25 = vld [vmem:[%s1 + $0x10] sm:$0xff]
    %v26 = vld [vmem:[%s1 + $0x18] sm:$0xff]
    %v27 = vld [vmem:[%s1 + $0x20] sm:$0xff]
    %v28 = vld [vmem:[%s1 + $0x28] sm:$0xff]
    %v29 = vld [vmem:[%s2] sm:$0x7]
    %v31 = vlaneseq
    %v32 = vshrl.u32 %v31, 7
    %v33 = vsub.s32 0, %v32
    %v34 = vrot.slane %v29, %v33
    %v35 = vlaneseq
    %v36 = vshrl.u32 %v35, 7
    %v37 = vsub.s32 1, %v36
    %v38 = vrot.slane %v29, %v37
    %v39 = vlaneseq
    %v40 = vshrl.u32 %v39, 7
    %v41 = vsub.s32 2, %v40
    %v42 = vrot.slane %v29, %v41
    %vm46 = vcmask 130048
    %v48 = vsel %vm46, %v15, 0
    %v51 = vsel %vm46, %v16, 0
    %v54 = vsel %vm46, %v17, 0
    %v57 = vsel %vm46, %v18, 0
    %v60 = vsel %vm46, %v19, 0
    %v63 = vsel %vm46, %v20, 0
    %v66 = vsel %vm46, %v21, 0
    %v69 = vsel %vm46, %v22, 0
    %71 = vmatprep.subr.mxu0 %v24
    %72 = vmatpush1.msra.mxu0 %v23
    %73 = vmatprep.subr.mxu0 %v27
    %74 = vmatpush1.msra.mxu0 %v26
    %75 = vmatprep.subr.mxu0 0.0
    %76 = vmatpush1.msra.mxu0 0.0
    %77 = vmatprep.subr.mxu0 0.0
    %78 = vmatpush1.msra.mxu0 0.0
    %79 = vmatprep.subr.mxu0 0.0
    %80 = vmatpush1.msra.mxu0 0.0
    %81 = vmatprep.subr.mxu0 0.0
    %82 = vmatpush1.msra.mxu0 0.0
    %83 = vmatprep.subr.mxu0 0.0
    %84 = vmatpush1.msra.mxu0 0.0
    %85 = vmatprep.subr.mxu0 0.0
    %86 = vmatpush1.msra.mxu0 0.0
    %87 = vmatprep.subr.mxu0 0.0
    %88 = vmatpush1.msra.mxu0 0.0
    %89 = vmatprep.subr.mxu0 0.0
    %90 = vmatpush1.msra.mxu0 0.0
    %91 = vmatprep.subr.mxu0 0.0
    %92 = vmatpush1.msra.mxu0 0.0
    %93 = vmatprep.subr.mxu0 0.0
    %94 = vmatpush1.msra.mxu0 0.0
    %95 = vmatprep.subr.mxu0 0.0
    %96 = vmatpush1.msra.mxu0 0.0
    %97 = vmatprep.subr.mxu0 0.0
    %98 = vmatpush1.msra.mxu0 0.0
    %99 = vmatprep.subr.mxu0 0.0
    %100 = vmatpush1.msra.mxu0 0.0
    %101 = vmatprep.subr.mxu0 0.0
    %102 = vmatpush1.msra.mxu0 0.0
    %103 = vmatprep.subr.mxu0 0.0
    %104 = vmatpush1.msra.mxu0 0.0
    %105 = vmatprep.subr.mxu0 0.0
    %106 = vmatpush1.msra.mxu0 0.0
    %107 = vmatprep.subr.mxu0 0.0
    %108 = vmatpush1.msra.mxu0 0.0
    %109 = vmatprep.subr.mxu0 0.0
    %110 = vmatpush1.msra.mxu0 0.0
    %111 = vmatprep.subr.mxu0 0.0
    %112 = vmatpush1.msra.mxu0 0.0
    %113 = vmatprep.subr.mxu0 0.0
    %114 = vmatpush1.msra.mxu0 0.0
    %115 = vmatprep.subr.mxu0 0.0
    %116 = vmatpush1.msra.mxu0 0.0
    %117 = vmatprep.subr.mxu0 0.0
    %118 = vmatpush1.msra.mxu0 0.0
    %119 = vmatprep.subr.mxu0 0.0
    %120 = vmatpush1.msra.mxu0 0.0
    %121 = vmatprep.subr.mxu0 0.0
    %122 = vmatpush1.msra.mxu0 0.0
    %123 = vmatprep.subr.mxu0 0.0
    %124 = vmatpush1.msra.mxu0 0.0
    %125 = vmatprep.subr.mxu0 0.0
    %126 = vmatpush1.msra.mxu0 0.0
    %127 = vmatprep.subr.mxu0 0.0
    %128 = vmatpush1.msra.mxu0 0.0
    %129 = vmatprep.subr.mxu0 0.0
    %130 = vmatpush1.msra.mxu0 0.0
    %131 = vmatprep.subr.mxu0 0.0
    %132 = vmatpush1.msra.mxu0 0.0
    %133 = vmatprep.subr.mxu0 0.0
    %134 = vmatpush1.msra.mxu0 0.0
    %135 = vmatprep.mubr.f32.mxu0 0.0
    %136 = vmatmul.mubr.f32.gmra.mrb[0].mxu0 %v48
    %v137 = vpop.f32.mrb[0].mxu0
    %v138 = vadd.f32 %v34, %v137
    %v139 = vpop.f32.mrb[0].mxu0
    %v140 = vadd.f32 %v38, %v139
    %141 = vmatprep.mubr.f32.mxu0 0.0
    %142 = vmatmul.mubr.f32.gmra.mrb[0].mxu0 %v51
    %v143 = vpop.f32.mrb[0].mxu0
    %v144 = vadd.f32 %v34, %v143
    %v145 = vpop.f32.mrb[0].mxu0
    %v146 = vadd.f32 %v38, %v145
    %147 = vmatprep.mubr.f32.mxu0 0.0
    %148 = vmatmul.mubr.f32.gmra.mrb[0].mxu0 %v54
    %v149 = vpop.f32.mrb[0].mxu0
    %v150 = vadd.f32 %v34, %v149
    %v151 = vpop.f32.mrb[0].mxu0
    %v152 = vadd.f32 %v38, %v151
    %153 = vmatprep.mubr.f32.mxu0 0.0
    %154 = vmatmul.mubr.f32.gmra.mrb[0].mxu0 %v57
    %v155 = vpop.f32.mrb[0].mxu0
    %v156 = vadd.f32 %v34, %v155
    %v157 = vpop.f32.mrb[0].mxu0
    %v158 = vadd.f32 %v38, %v157
    %159 = vmatprep.mubr.f32.mxu0 0.0
    %160 = vmatmul.mubr.f32.gmra.mrb[0].mxu0 %v60
    %v161 = vpop.f32.mrb[0].mxu0
    %v162 = vadd.f32 %v34, %v161
    %v163 = vpop.f32.mrb[0].mxu0
    %v164 = vadd.f32 %v38, %v163
    %165 = vmatprep.mubr.f32.mxu0 0.0
    %166 = vmatmul.mubr.f32.gmra.mrb[0].mxu0 %v63
    %v167 = vpop.f32.mrb[0].mxu0
    %v168 = vadd.f32 %v34, %v167
    %v169 = vpop.f32.mrb[0].mxu0
    %v170 = vadd.f32 %v38, %v169
    %171 = vmatprep.mubr.f32.mxu0 0.0
    %172 = vmatmul.mubr.f32.gmra.mrb[0].mxu0 %v66
    %v173 = vpop.f32.mrb[0].mxu0
    %v174 = vadd.f32 %v34, %v173
    %v175 = vpop.f32.mrb[0].mxu0
    %v176 = vadd.f32 %v38, %v175
    %177 = vmatprep.mubr.f32.mxu0 0.0
    %178 = vmatmul.mubr.f32.gmra.mrb[0].mxu0 %v69
    %v179 = vpop.f32.mrb[0].mxu0
    %v180 = vadd.f32 %v34, %v179
    %v181 = vpop.f32.mrb[0].mxu0
    %v182 = vadd.f32 %v38, %v181
    %183 = vdwg.mxu0
    %184 = vmatprep.subr.mxu0 0.0
    %185 = vmatpush1.msra.mxu0 %v25
    %186 = vmatprep.subr.mxu0 0.0
    %187 = vmatpush1.msra.mxu0 %v28
    %188 = vmatprep.subr.mxu0 0.0
    %189 = vmatpush1.msra.mxu0 0.0
    %190 = vmatprep.subr.mxu0 0.0
    %191 = vmatpush1.msra.mxu0 0.0
    %192 = vmatprep.subr.mxu0 0.0
    %193 = vmatpush1.msra.mxu0 0.0
    %194 = vmatprep.subr.mxu0 0.0
    %195 = vmatpush1.msra.mxu0 0.0
    %196 = vmatprep.subr.mxu0 0.0
    %197 = vmatpush1.msra.mxu0 0.0
    %198 = vmatprep.subr.mxu0 0.0
    %199 = vmatpush1.msra.mxu0 0.0
    %200 = vmatprep.subr.mxu0 0.0
    %201 = vmatpush1.msra.mxu0 0.0
    %202 = vmatprep.subr.mxu0 0.0
    %203 = vmatpush1.msra.mxu0 0.0
    %204 = vmatprep.subr.mxu0 0.0
    %205 = vmatpush1.msra.mxu0 0.0
    %206 = vmatprep.subr.mxu0 0.0
    %207 = vmatpush1.msra.mxu0 0.0
    %208 = vmatprep.subr.mxu0 0.0
    %209 = vmatpush1.msra.mxu0 0.0
    %210 = vmatprep.subr.mxu0 0.0
    %211 = vmatpush1.msra.mxu0 0.0
    %212 = vmatprep.subr.mxu0 0.0
    %213 = vmatpush1.msra.mxu0 0.0
    %214 = vmatprep.subr.mxu0 0.0
    %215 = vmatpush1.msra.mxu0 0.0
    %216 = vmatprep.subr.mxu0 0.0
    %217 = vmatpush1.msra.mxu0 0.0
    %218 = vmatprep.subr.mxu0 0.0
    %219 = vmatpush1.msra.mxu0 0.0
    %220 = vmatprep.subr.mxu0 0.0
    %221 = vmatpush1.msra.mxu0 0.0
    %222 = vmatprep.subr.mxu0 0.0
    %223 = vmatpush1.msra.mxu0 0.0
    %224 = vmatprep.subr.mxu0 0.0
    %225 = vmatpush1.msra.mxu0 0.0
    %226 = vmatprep.subr.mxu0 0.0
    %227 = vmatpush1.msra.mxu0 0.0
    %228 = vmatprep.subr.mxu0 0.0
    %229 = vmatpush1.msra.mxu0 0.0
    %230 = vmatprep.subr.mxu0 0.0
    %231 = vmatpush1.msra.mxu0 0.0
    %232 = vmatprep.subr.mxu0 0.0
    %233 = vmatpush1.msra.mxu0 0.0
    %234 = vmatprep.subr.mxu0 0.0
    %235 = vmatpush1.msra.mxu0 0.0
    %236 = vmatprep.subr.mxu0 0.0
    %237 = vmatpush1.msra.mxu0 0.0
    %238 = vmatprep.subr.mxu0 0.0
    %239 = vmatpush1.msra.mxu0 0.0
    %240 = vmatprep.subr.mxu0 0.0
    %241 = vmatpush1.msra.mxu0 0.0
    %242 = vmatprep.subr.mxu0 0.0
    %243 = vmatpush1.msra.mxu0 0.0
    %244 = vmatprep.subr.mxu0 0.0
    %245 = vmatpush1.msra.mxu0 0.0
    %246 = vmatprep.subr.mxu0 0.0
    %247 = vmatpush1.msra.mxu0 0.0
    %248 = vmatprep.mubr.f32.mxu0 0.0
    %249 = vmatmul.mubr.f32.gmra.mrb[0].mxu0 %v48
    %v250 = vpop.f32.mrb[0].mxu0
    %v251 = vadd.f32 %v42, %v250
    %v252 = vpop.f32.mrb[0].mxu0
    %253 = vmatprep.mubr.f32.mxu0 0.0
    %254 = vmatmul.mubr.f32.gmra.mrb[0].mxu0 %v51
    %v255 = vpop.f32.mrb[0].mxu0
    %v256 = vadd.f32 %v42, %v255
    %v257 = vpop.f32.mrb[0].mxu0
    %258 = vmatprep.mubr.f32.mxu0 0.0
    %259 = vmatmul.mubr.f32.gmra.mrb[0].mxu0 %v54
    %v260 = vpop.f32.mrb[0].mxu0
    %v261 = vadd.f32 %v42, %v260
    %v262 = vpop.f32.mrb[0].mxu0
    %263 = vmatprep.mubr.f32.mxu0 0.0
    %264 = vmatmul.mubr.f32.gmra.mrb[0].mxu0 %v57
    %v265 = vpop.f32.mrb[0].mxu0
    %v266 = vadd.f32 %v42, %v265
    %v267 = vpop.f32.mrb[0].mxu0
    %268 = vmatprep.mubr.f32.mxu0 0.0
    %269 = vmatmul.mubr.f32.gmra.mrb[0].mxu0 %v60
    %v270 = vpop.f32.mrb[0].mxu0
    %v271 = vadd.f32 %v42, %v270
    %v272 = vpop.f32.mrb[0].mxu0
    %273 = vmatprep.mubr.f32.mxu0 0.0
    %274 = vmatmul.mubr.f32.gmra.mrb[0].mxu0 %v63
    %v275 = vpop.f32.mrb[0].mxu0
    %v276 = vadd.f32 %v42, %v275
    %v277 = vpop.f32.mrb[0].mxu0
    %278 = vmatprep.mubr.f32.mxu0 0.0
    %279 = vmatmul.mubr.f32.gmra.mrb[0].mxu0 %v66
    %v280 = vpop.f32.mrb[0].mxu0
    %v281 = vadd.f32 %v42, %v280
    %v282 = vpop.f32.mrb[0].mxu0
    %283 = vmatprep.mubr.f32.mxu0 0.0
    %284 = vmatmul.mubr.f32.gmra.mrb[0].mxu0 %v69
    %v285 = vpop.f32.mrb[0].mxu0
    %v286 = vadd.f32 %v42, %v285
    %v287 = vpop.f32.mrb[0].mxu0
    %288 = vdwg.mxu0
    %289 = vst [vmem:[#allocation2] sm:$0xff] %v138
    %290 = vst [vmem:[#allocation2 + $0x8] sm:$0xff] %v140
    %291 = vst [vmem:[#allocation2 + $0x10] sm:$0xff] %v251
    %292 = vst [vmem:[#allocation2 + $0x18] sm:$0xff] %v144
    %293 = vst [vmem:[#allocation2 + $0x20] sm:$0xff] %v146
    %294 = vst [vmem:[#allocation2 + $0x28] sm:$0xff] %v256
    %295 = vst [vmem:[#allocation2 + $0x30] sm:$0xff] %v150
    %296 = vst [vmem:[#allocation2 + $0x38] sm:$0xff] %v152
    %297 = vst [vmem:[#allocation2 + $0x40] sm:$0xff] %v261
    %298 = vst [vmem:[#allocation2 + $0x48] sm:$0xff] %v156
    %299 = vst [vmem:[#allocation2 + $0x50] sm:$0xff] %v158
    %300 = vst [vmem:[#allocation2 + $0x58] sm:$0xff] %v266
    %301 = vst [vmem:[#allocation2 + $0x60] sm:$0xff] %v162
    %302 = vst [vmem:[#allocation2 + $0x68] sm:$0xff] %v164
    %303 = vst [vmem:[#allocation2 + $0x70] sm:$0xff] %v271
    %304 = vst [vmem:[#allocation2 + $0x78] sm:$0xff] %v168
    %305 = vst [vmem:[#allocation2 + $0x80] sm:$0xff] %v170
    %306 = vst [vmem:[#allocation2 + $0x88] sm:$0xff] %v276
    %307 = vst [vmem:[#allocation2 + $0x90] sm:$0xff] %v174
    %308 = vst [vmem:[#allocation2 + $0x98] sm:$0xff] %v176
    %309 = vst [vmem:[#allocation2 + $0xa0] sm:$0xff] %v281
    %310 = vst [vmem:[#allocation2 + $0xa8] sm:$0xff] %v180
    %311 = vst [vmem:[#allocation2 + $0xb0] sm:$0xff] %v182
    %312 = vst [vmem:[#allocation2 + $0xb8] sm:$0xff] %v286
    // Predicated region
    $region14: #{tpu_custom_call.1} parent=1 // pred_check
      _
    $region15: #{tpu_custom_call.1} parent=1 // pred_check_branch
      %314 = sbr.rel (0) target = $region17
    $region16: #{tpu_custom_call.1} parent=1 // pred_region
      %s316 = ssub.s32 3072, 3072
      %317 = vsyncadd [#allocation3], %s316
      %s318 = sshll.u32 [#allocation2], 4
      %s319 = int_to_ptr.vmem [resolvable:$true] %s318
      %324 = dma.vmem_to_hbm [thread:$0]  %s319, 3072, %s3, [#allocation3], 384, 384, 24
    $region17: #{tpu_custom_call.1} parent=1 // pred_fallthru
      _
    // Predicated region
    $region18: #{tpu_custom_call.1} parent=1 // pred_check
      _
    $region19: #{tpu_custom_call.1} parent=1 // pred_check_branch
      %326 = sbr.rel (0) target = $region21
    $region20: #{tpu_custom_call.1} parent=1 // pred_region
      %327 = dma.done [#allocation3], 3072
    $region21: #{tpu_custom_call.1} parent=1 // pred_fallthru
      _
    %328 = vsyncpa [#allocation3], 1

</llo_original>
